<compile_context>
chip_gen: v5e
topology: v5e:2x2
jax: 0.10.0
libtpu: 0.0.40
codegen_flags: <defaults>
</compile_context>

<pallas_src>
import math

import jax
import jax.numpy as jnp
from jax.experimental import pallas as pl
from jax.experimental.pallas import tpu as pltpu

_LANES = 128
_SUBLANES = 8
# Per-buffer tile budget: 3 arrays x 2 pipeline buffers x 2 MiB = 12 MiB,
# comfortably inside v7x's 32 MiB scoped / 64 MiB physical VMEM.
_TILE_BYTES_CAP = 2 * 1024 * 1024


def make_sinusoidal_pe(max_len: int, d_model: int) -> jnp.ndarray:
    """Deterministic buffer, identical to the PyTorch __init__ construction."""
    position = jnp.arange(0, max_len, dtype=jnp.float32)[:, None]          # (max_len, 1)
    div_term = jnp.exp(
        jnp.arange(0, d_model, 2, dtype=jnp.float32)
        * (-math.log(10000.0) / d_model)
    )                                                                       # (d_model//2,)
    angles = position * div_term                                            # (max_len, d_model//2)
    pe = jnp.zeros((max_len, d_model), dtype=jnp.float32)
    pe = pe.at[:, 0::2].set(jnp.sin(angles))
    pe = pe.at[:, 1::2].set(jnp.cos(angles))
    return pe                                                               # (max_len, d_model)


def _pe_add_kernel(x_ref, pe_ref, o_ref):
    # Elementwise hot path: x + positional encoding (VPU add; DMA pipelined by grid).
    # pe is cast on the VMEM tile (free-ish VPU cast) rather than in the wrapper.
    o_ref[...] = (x_ref[...] + pe_ref[...].astype(x_ref.dtype)).astype(o_ref.dtype)
    # TODO(synk): training-mode dropout (p=0.1) omitted; eval-mode identity used,
    # since PyTorch's RNG-dependent mask has no bit-exact Pallas equivalent.


def _pick_tile_rows(n_rows: int, width: int, itemsize: int) -> int:
    """Largest sublane-aligned row tile under the per-buffer byte budget."""
    cap = (_TILE_BYTES_CAP // (width * itemsize)) // _SUBLANES * _SUBLANES
    cap = max(cap, _SUBLANES)
    aligned = ((n_rows + _SUBLANES - 1) // _SUBLANES) * _SUBLANES
    return min(cap, max(aligned, _SUBLANES))


def _tiled_row_add(x2d: jnp.ndarray, pe2d: jnp.ndarray, tile_rows: int) -> jnp.ndarray:
    """out[i, :] = x2d[i, :] + pe2d[i, :] for the first n_rows rows (pe2d may be taller)."""
    n_rows, width = x2d.shape
    grid = (pl.cdiv(n_rows, tile_rows),)
    return pl.pallas_call(
        _pe_add_kernel,
        out_shape=jax.ShapeDtypeStruct((n_rows, width), x2d.dtype),
        grid_spec=pltpu.PrefetchScalarGridSpec(
            num_scalar_prefetch=0,
            grid=grid,
            in_specs=[
                pl.BlockSpec((tile_rows, width), lambda i: (i, 0)),
                # pe rows are sliced here, directly from the full table/slab in HBM.
                pl.BlockSpec((tile_rows, width), lambda i: (i, 0)),
            ],
            out_specs=pl.BlockSpec((tile_rows, width), lambda i: (i, 0)),
        ),
        compiler_params=pltpu.CompilerParams(
            # Independent tiles -> shard across both TensorCores on v7x.
            dimension_semantics=("parallel",),
            vmem_limit_bytes=32 * 1024 * 1024,
        ),
    )(x2d, pe2d)


def positional_encoding_forward(x: jnp.ndarray, pe_table: jnp.ndarray) -> jnp.ndarray:
    """x: (seq_len, d_model); pe_table: (max_len, d_model). Returns x + pe[:seq_len]."""
    seq_len, d_model = x.shape
    max_len = pe_table.shape[0]
    itemsize = jnp.dtype(x.dtype).itemsize
    total = seq_len * d_model

    if d_model % _LANES != 0 and total % _LANES == 0:
        # Lane-dense slab layout: row-major reshape is pure layout plumbing and the
        # add is reshape-invariant. Avoids masked partial stores for narrow d_model.
        n_rows = total // _LANES
        pe_elems = max_len * d_model
        if pe_elems % _LANES == 0:
            pe2d = pe_table.reshape(pe_elems // _LANES, _LANES)       # metadata-only reshape
        else:
            pe2d = pe_table.reshape(-1)[:total].reshape(n_rows, _LANES)
        x2d = x.reshape(n_rows, _LANES)
        tile = _pick_tile_rows(n_rows, _LANES, itemsize)
        out = _tiled_row_add(x2d, pe2d, tile)
        return out.reshape(seq_len, d_model)

    # Direct layout: seq_len rows (sublanes), d_model lanes. pe rows selected via
    # the BlockSpec index_map from the full table — no wrapper-side slice.
    tile = _pick_tile_rows(seq_len, d_model, itemsize)
    return _tiled_row_add(x, pe_table, tile)


if __name__ == "__main__":
    d_model = 32
    max_len = 128

    key = jax.random.PRNGKey(0)
    pe_table = make_sinusoidal_pe(max_len, d_model)

    # Main test: default-ish shapes, exercises the lane-dense slab path.
    seq_len = 32
    x = jax.random.normal(key, (seq_len, d_model), dtype=jnp.float32)
    out = positional_encoding_forward(x, pe_table)
    out = jax.block_until_ready(out)
    ref = x + pe_table[:seq_len, :]
    assert out.shape == (seq_len, d_model)
    assert jnp.allclose(out, ref, atol=1e-6), "mismatch vs reference (slab path)"

    # Secondary test: ragged seq_len, exercises the direct (non-slab) path.
    seq_len2 = 10
    x2 = jax.random.normal(jax.random.PRNGKey(1), (seq_len2, d_model), dtype=jnp.float32)
    out2 = positional_encoding_forward(x2, pe_table)
    out2 = jax.block_until_ready(out2)
    ref2 = x2 + pe_table[:seq_len2, :]
    assert out2.shape == (seq_len2, d_model)
    assert jnp.allclose(out2, ref2, atol=1e-6), "mismatch vs reference (direct path)"

    print("KERNEL_OK")
</pallas_src>

<mosaic_0001>
module attributes {stable_mosaic.version = 11 : i64} {
  func.func @_pe_add_kernel(%arg0: i32, %arg1: memref<8x128xf32, #tpu.memory_space<vmem>>, %arg2: memref<8x128xf32, #tpu.memory_space<vmem>>, %arg3: memref<8x128xf32, #tpu.memory_space<vmem>>) attributes {dimension_semantics = [#tpu.dimension_semantics<parallel>], iteration_bounds = array<i64: 1>, scalar_prefetch = 0 : i64, scratch_operands = 0 : i64, tpu.core_type = #tpu.core_type<tc>, window_params = [{transform_indices = @transform_0, window_bounds = array<i64: 8, 128>}, {transform_indices = @transform_1, window_bounds = array<i64: 8, 128>}, {transform_indices = @transform_2, window_bounds = array<i64: 8, 128>}]} {
    %c0 = arith.constant 0 : index
    %c0_0 = arith.constant 0 : index
    %0 = vector.load %arg1[%c0, %c0_0] : memref<8x128xf32, #tpu.memory_space<vmem>>, vector<8x128xf32>
    %c0_1 = arith.constant 0 : index
    %c0_2 = arith.constant 0 : index
    %1 = vector.load %arg2[%c0_1, %c0_2] : memref<8x128xf32, #tpu.memory_space<vmem>>, vector<8x128xf32>
    %2 = arith.addf %0, %1 : vector<8x128xf32>
    %c0_3 = arith.constant 0 : index
    %c0_4 = arith.constant 0 : index
    %3 = vector.load %arg3[%c0_3, %c0_4] : memref<8x128xf32, #tpu.memory_space<vmem>>, vector<8x128xf32>
    tpu.vector_store %arg3[%c0_3, %c0_4], %2 {strides = array<i32>} : memref<8x128xf32, #tpu.memory_space<vmem>>, vector<8x128xf32>,
    return
  }
  func.func @transform_0(%arg0: i32) -> (i32, i32) {
    %c0_i32 = arith.constant 0 : i32
    %c0_i32_0 = arith.constant 0 : i32
    return %arg0, %c0_i32 : i32, i32
  }
  func.func @transform_1(%arg0: i32) -> (i32, i32) {
    %c0_i32 = arith.constant 0 : i32
    %c0_i32_0 = arith.constant 0 : i32
    return %arg0, %c0_i32 : i32, i32
  }
  func.func @transform_2(%arg0: i32) -> (i32, i32) {
    %c0_i32 = arith.constant 0 : i32
    %c0_i32_0 = arith.constant 0 : i32
    return %arg0, %c0_i32 : i32, i32
  }
}

</mosaic_0001>

<llo_original>
// kernel: tpu_custom_call.1
$region0: #{tpu_custom_call.1}
  #allocation0 [shape = 'u32[]', space=smem, size = 0x4, offset = 0x4, fixed_abs, tag = 'smem constant byte address 0x4 - core index']
  #allocation1 [shape = 'u32[72,128]{1,0:T(1,128)}', space=vmem, size = 0x9000, scoped, tag = 'internal scratch']
  %s0 = inlined_call_operand.hbm [shape: f32[8,128], index: 0, kind: input, shape index: {}]
  %s1 = inlined_call_operand.hbm [shape: f32[32,128], index: 1, kind: input, shape index: {}]
  %s2 = inlined_call_operand.hbm [shape: f32[8,128], index: 2, kind: output, shape index: {}]
  %s3 = sld [smem:[#allocation0]]
  $region26: #{tpu_custom_call.1} parent=0
    _
  %s5 = ssub.s32 1, %s3
  %s6 = scalar_select 0, %s5, %s3
  $region1: #{tpu_custom_call.1} parent=0
    #allocation2 [shape = 'u8[4096]{0}', space=vmem, size = 0x1000, scoped, tag = 'input window, operand 0, single buffered']
    #allocation3 [shape = 's32[1]{0}', space=sflag, size = 0x4, scoped, tag = 'scoped memory for tpu_custom_call.1']
    #allocation4 [shape = 's32[1]{0}', space=sflag, size = 0x4, scoped, tag = 'scoped memory for tpu_custom_call.1']
    #allocation5 [shape = 'u8[4096]{0}', space=vmem, size = 0x1000, scoped, tag = 'input window, operand 1, single buffered']
    #allocation6 [shape = 's32[1]{0}', space=sflag, size = 0x4, scoped, tag = 'scoped memory for tpu_custom_call.1']
    #allocation7 [shape = 'u8[4096]{0}', space=vmem, size = 0x1000, scoped, tag = 'output window, operand 0, single buffered']
    %7 = vsyncpa [#allocation3], 0
    %8 = vsyncpa [#allocation6], 0
    %9 = vsyncpa [#allocation4], 0
    // Predicated region
    $region2: #{tpu_custom_call.1} parent=1 // pred_check
      _
    $region3: #{tpu_custom_call.1} parent=1 // pred_check_branch
      %11 = sbr.rel (0) target = $region5
    $region4: #{tpu_custom_call.1} parent=1 // pred_region
      %13 = vsyncadd [#allocation3], 0
      %s15 = sshll.u32 %s0, 4
      %s16 = int_to_ptr.hbm [resolvable:$true] %s15
      %s17 = sshll.u32 [#allocation2], 4
      %s18 = int_to_ptr.vmem [resolvable:$true] %s17
      %20 = dma.hbm_to_vmem [thread:$0]  %s16, 128, %s18, [#allocation3]
    $region5: #{tpu_custom_call.1} parent=1 // pred_fallthru
      _
    // Predicated region
    $region6: #{tpu_custom_call.1} parent=1 // pred_check
      _
    $region7: #{tpu_custom_call.1} parent=1 // pred_check_branch
      %22 = sbr.rel (0) target = $region9
    $region8: #{tpu_custom_call.1} parent=1 // pred_region
      %24 = vsyncadd [#allocation6], 0
      %s26 = sshll.u32 %s1, 4
      %s27 = int_to_ptr.hbm [resolvable:$true] %s26
      %s28 = sshll.u32 [#allocation5], 4
      %s29 = int_to_ptr.vmem [resolvable:$true] %s28
      %31 = dma.hbm_to_vmem [thread:$0]  %s27, 128, %s29, [#allocation6]
    $region9: #{tpu_custom_call.1} parent=1 // pred_fallthru
      _
    // Predicated region
    $region10: #{tpu_custom_call.1} parent=1 // pred_check
      _
    $region11: #{tpu_custom_call.1} parent=1 // pred_check_branch
      %33 = sbr.rel (0) target = $region13
    $region12: #{tpu_custom_call.1} parent=1 // pred_region
      %35 = dma.done [#allocation3], 128
    $region13: #{tpu_custom_call.1} parent=1 // pred_fallthru
      _
    // Predicated region
    $region14: #{tpu_custom_call.1} parent=1 // pred_check
      _
    $region15: #{tpu_custom_call.1} parent=1 // pred_check_branch
      %37 = sbr.rel (0) target = $region17
    $region16: #{tpu_custom_call.1} parent=1 // pred_region
      %39 = dma.done [#allocation6], 128
    $region17: #{tpu_custom_call.1} parent=1 // pred_fallthru
      _
    %v40 = vld [vmem:[#allocation2] sm:$0xff]
    %v41 = vld [vmem:[#allocation5] sm:$0xff]
    %v42 = vadd.f32 %v40, %v41
    %43 = vst [vmem:[#allocation7] sm:$0xff] %v42
    // Predicated region
    $region18: #{tpu_custom_call.1} parent=1 // pred_check
      _
    $region19: #{tpu_custom_call.1} parent=1 // pred_check_branch
      %45 = sbr.rel (0) target = $region21
    $region20: #{tpu_custom_call.1} parent=1 // pred_region
      %47 = vsyncadd [#allocation4], 0
      %s49 = sshll.u32 [#allocation7], 4
      %s50 = int_to_ptr.vmem [resolvable:$true] %s49
      %s51 = sshll.u32 %s2, 4
      %s52 = int_to_ptr.hbm [resolvable:$true] %s51
      %54 = dma.vmem_to_hbm [thread:$0]  %s50, 128, %s52, [#allocation4]
    $region21: #{tpu_custom_call.1} parent=1 // pred_fallthru
      _
    // Predicated region
    $region22: #{tpu_custom_call.1} parent=1 // pred_check
      _
    $region23: #{tpu_custom_call.1} parent=1 // pred_check_branch
      %56 = sbr.rel (0) target = $region25
    $region24: #{tpu_custom_call.1} parent=1 // pred_region
      %58 = dma.done [#allocation4], 128
    $region25: #{tpu_custom_call.1} parent=1 // pred_fallthru
      _
    %59 = vsyncpa [#allocation3], 1
    %60 = vsyncpa [#allocation6], 1
    %61 = vsyncpa [#allocation4], 1

</llo_original>
